<compile_context>
chip_gen: v5e
topology: v5e:2x2
jax: 0.10.0
libtpu: 0.0.40
codegen_flags: <defaults>
</compile_context>

<pallas_src>
import math

import jax
import jax.numpy as jnp
from jax.experimental import pallas as pl
from jax.experimental.pallas import tpu as pltpu


NEG_SLOPE = 0.01    # PyTorch nn.LeakyReLU default
FEAT = 256          # feature dim expected by the classifier
OUT_PAD = 128       # last-layer output padded to a full lane width


def _leaky_relu(v):
    return jnp.where(v >= 0, v, NEG_SLOPE * v)


def _round_up(v, m):
    return ((v + m - 1) // m) * m


def net_kernel(x_ref, wfe_ref, bfe_ref,
               w1_ref, b1_ref, w2_ref, b2_ref, w3_ref, b3_ref,
               o_ref, acc_ref):
    """K-tiled feature matmul + classifier tail.

    x_ref   : (B_T, tk)      bf16 slice of the flattened input
    wfe_ref : (tk, 256)      bf16 slice of the surrogate feature FC
    w1/w2/w3: bf16 classifier weights (VMEM-resident, tiny; w3 padded to 128)
    biases  : (1, N) f32
    acc_ref : (B_T, 256)     f32 accumulator scratch
    o_ref   : (B_T, OUT_PAD) f32 lane-dense output block
    """
    k = pl.program_id(1)

    @pl.when(k == 0)
    def _():
        acc_ref[...] = jnp.zeros_like(acc_ref)

    # Dominant matmul, accumulated over the K grid axis in f32.
    acc_ref[...] += jnp.dot(x_ref[...], wfe_ref[...],
                            preferred_element_type=jnp.float32)

    # Classifier tail only on the final reduction step.
    @pl.when(k == pl.num_programs(1) - 1)
    def _():
        h = _leaky_relu(acc_ref[...] + bfe_ref[...])              # (B_T, 256) f32

        h = jnp.dot(h.astype(w1_ref.dtype), w1_ref[...],
                    preferred_element_type=jnp.float32) + b1_ref[...]
        # nn.Dropout(0.25): identity at inference time.
        h = _leaky_relu(h)                                        # (B_T, 128) f32

        h = jnp.dot(h.astype(w2_ref.dtype), w2_ref[...],
                    preferred_element_type=jnp.float32) + b2_ref[...]
        h = _leaky_relu(h)                                        # (B_T, 16) f32

        h = jnp.dot(h.astype(w3_ref.dtype), w3_ref[...],
                    preferred_element_type=jnp.float32) + b3_ref[...]
        o_ref[...] = h.astype(o_ref.dtype)                        # (B_T, 128)


def init_params(key, f_in, dtype=jnp.bfloat16):
    """PyTorch-style Linear init: U(-1/sqrt(fan_in), 1/sqrt(fan_in)).

    Weights are cast to bf16 (MXU-native); biases stay f32 (added to the f32
    accumulator inside the kernel).
    """
    dims = [(f_in, FEAT), (FEAT, 128), (128, 16), (16, 2)]
    params = []
    for fan_in, fan_out in dims:
        key, kw, kb = jax.random.split(key, 3)
        bound = 1.0 / math.sqrt(fan_in)
        w = jax.random.uniform(kw, (fan_in, fan_out), jnp.float32, -bound, bound)
        b = jax.random.uniform(kb, (1, fan_out), jnp.float32, -bound, bound)
        params += [w.astype(dtype), b]
    return params


def net_forward(x, params, *, b_tile=256, k_tile=2048):
    """x: (B, C, D, H, W) volume (NCDHW, like the PyTorch module)."""
    wfe, bfe, w1, b1, w2, b2, w3, b3 = params
    B = x.shape[0]
    f_in = wfe.shape[0]

    x2 = x.reshape(B, -1).astype(wfe.dtype)              # glue: flatten + bf16 cast
    assert x2.shape[1] == f_in, (x2.shape, f_in)

    # --- tiling ------------------------------------------------------------
    tk = min(k_tile, _round_up(f_in, 128))               # lane-aligned K tile
    f_pad = _round_up(f_in, tk)
    bt = min(b_tile, _round_up(B, 8))                    # sublane-aligned batch tile
    b_pad = _round_up(B, bt)

    if (b_pad, f_pad) != (B, f_in):
        x2 = jnp.pad(x2, ((0, b_pad - B), (0, f_pad - f_in)))
    if f_pad != f_in:
        wfe = jnp.pad(wfe, ((0, f_pad - f_in), (0, 0)))   # zero rows: no-op in dot

    # Lane-dense output: pad the (16, 2) last layer to (16, 128) so the kernel
    # emits full, unmasked vector stores.  Extra columns compute exact zeros.
    n_out = w3.shape[1]
    w3p = jnp.pad(w3, ((0, 0), (0, OUT_PAD - n_out)))
    b3p = jnp.pad(b3, ((0, 0), (0, OUT_PAD - n_out)))

    nb = b_pad // bt
    nk = f_pad // tk
    dsz = jnp.dtype(wfe.dtype).itemsize
    tail_w = FEAT * 128 + 128 * 16 + 16 * OUT_PAD
    tail_b = FEAT + 128 + 16 + OUT_PAD

    cost = pl.CostEstimate(
        flops=2 * b_pad * f_pad * FEAT + 2 * b_pad * tail_w,
        transcendentals=0,
        bytes_accessed=(b_pad * f_pad + f_pad * FEAT) * dsz
                       + tail_w * dsz + tail_b * 4 + b_pad * OUT_PAD * 4,
    )

    # VMEM budget: double-buffered first-layer tiles + f32 accumulator +
    # resident tail weights + output block.  Capped at 48 MiB so it also fits
    # v7x's 64 MiB physical VMEM with headroom.
    vmem_need = (2 * (bt * tk + tk * FEAT) * dsz
                 + bt * FEAT * 4
                 + 2 * (tail_w * dsz + tail_b * 4)
                 + 2 * bt * OUT_PAD * 4)
    vmem_limit = int(min(vmem_need + (8 << 20), 48 << 20))

    def full(arr):
        nd = arr.ndim
        return pl.BlockSpec(arr.shape, lambda b, k, _nd=nd: (0,) * _nd)

    grid_spec = pltpu.PrefetchScalarGridSpec(
        num_scalar_prefetch=0,
        grid=(nb, nk),
        in_specs=[
            pl.BlockSpec((bt, tk), lambda b, k: (b, k)),      # x slice
            pl.BlockSpec((tk, FEAT), lambda b, k: (k, 0)),    # wfe slice
            full(bfe), full(w1), full(b1),
            full(w2), full(b2), full(w3p), full(b3p),
        ],
        out_specs=pl.BlockSpec((bt, OUT_PAD), lambda b, k: (b, 0)),
        scratch_shapes=[pltpu.VMEM((bt, FEAT), jnp.float32)],
    )

    out = pl.pallas_call(
        net_kernel,
        out_shape=jax.ShapeDtypeStruct((b_pad, OUT_PAD), jnp.float32),
        grid_spec=grid_spec,
        compiler_params=pltpu.CompilerParams(
            dimension_semantics=("parallel", "arbitrary"),
            vmem_limit_bytes=vmem_limit,
        ),
        cost_estimate=cost,
    )(x2, wfe, bfe, w1, b1, w2, b2, w3p, b3p)

    return out[:B, :n_out]


def net_forward_ref(x, params):
    """Pure-JAX reference of the same (bf16-weight, f32-accum) math."""
    wfe, bfe, w1, b1, w2, b2, w3, b3 = params
    B = x.shape[0]
    h = x.reshape(B, -1).astype(wfe.dtype)
    h = _leaky_relu(jnp.dot(h, wfe, preferred_element_type=jnp.float32) + bfe)
    h = _leaky_relu(jnp.dot(h.astype(w1.dtype), w1,
                            preferred_element_type=jnp.float32) + b1)
    h = _leaky_relu(jnp.dot(h.astype(w2.dtype), w2,
                            preferred_element_type=jnp.float32) + b2)
    return jnp.dot(h.astype(w3.dtype), w3,
                   preferred_element_type=jnp.float32) + b3


if __name__ == "__main__":
    key = jax.random.PRNGKey(0)
    k_x, k_p = jax.random.split(key)

    # Small shapes consistent with the module: NCDHW volume, single channel.
    B, C, D, H, W = 2, 1, 8, 8, 8
    x = jax.random.normal(k_x, (B, C, D, H, W), jnp.float32)

    params = init_params(k_p, C * D * H * W)

    out = jax.block_until_ready(net_forward(x, params))
    ref = net_forward_ref(x, params)

    assert out.shape == (B, 2), out.shape
    assert jnp.allclose(out, ref, atol=2e-2, rtol=2e-2), (out, ref)

    print("KERNEL_OK")
</pallas_src>

<mosaic_0001>
module attributes {stable_mosaic.version = 11 : i64} {
  func.func @net_kernel(%arg0: i32, %arg1: i32, %arg2: memref<8x512xbf16, #tpu.memory_space<vmem>>, %arg3: memref<512x256xbf16, #tpu.memory_space<vmem>>, %arg4: memref<1x256xf32, #tpu.memory_space<vmem>>, %arg5: memref<256x128xbf16, #tpu.memory_space<vmem>>, %arg6: memref<1x128xf32, #tpu.memory_space<vmem>>, %arg7: memref<128x16xbf16, #tpu.memory_space<vmem>>, %arg8: memref<1x16xf32, #tpu.memory_space<vmem>>, %arg9: memref<16x128xbf16, #tpu.memory_space<vmem>>, %arg10: memref<1x128xf32, #tpu.memory_space<vmem>>, %arg11: memref<8x128xf32, #tpu.memory_space<vmem>>, %arg12: memref<8x256xf32, #tpu.memory_space<vmem>>) attributes {dimension_semantics = [#tpu.dimension_semantics<parallel>, #tpu.dimension_semantics<arbitrary>], iteration_bounds = array<i64: 1, 1>, scalar_prefetch = 0 : i64, scratch_operands = 1 : i64, tpu.core_type = #tpu.core_type<tc>, window_params = [{transform_indices = @transform_0, window_bounds = array<i64: 8, 512>}, {transform_indices = @transform_1, window_bounds = array<i64: 512, 256>}, {pipeline_mode = #tpu.pipeline_mode<synchronous>, transform_indices = @transform_2, window_bounds = array<i64: 1, 256>}, {pipeline_mode = #tpu.pipeline_mode<synchronous>, transform_indices = @transform_3, window_bounds = array<i64: 256, 128>}, {pipeline_mode = #tpu.pipeline_mode<synchronous>, transform_indices = @transform_4, window_bounds = array<i64: 1, 128>}, {pipeline_mode = #tpu.pipeline_mode<synchronous>, transform_indices = @transform_5, window_bounds = array<i64: 128, 16>}, {pipeline_mode = #tpu.pipeline_mode<synchronous>, transform_indices = @transform_6, window_bounds = array<i64: 1, 16>}, {pipeline_mode = #tpu.pipeline_mode<synchronous>, transform_indices = @transform_7, window_bounds = array<i64: 16, 128>}, {pipeline_mode = #tpu.pipeline_mode<synchronous>, transform_indices = @transform_8, window_bounds = array<i64: 1, 128>}, {transform_indices = @transform_9, window_bounds = array<i64: 8, 128>}]} {
    %c0_i32 = arith.constant 0 : i32
    %0 = arith.cmpi eq, %arg1, %c0_i32 : i32
    %1 = arith.extui %0 : i1 to i32
    %c0_i32_0 = arith.constant 0 : i32
    %2 = arith.cmpi ne, %1, %c0_i32_0 : i32
    scf.if %2 {
      %cst_10 = arith.constant 0.000000e+00 : f32
      %12 = vector.broadcast %cst_10 : f32 to vector<8x256xf32>
      %c0_11 = arith.constant 0 : index
      %c0_12 = arith.constant 0 : index
      %13 = vector.load %arg12[%c0_11, %c0_12] : memref<8x256xf32, #tpu.memory_space<vmem>>, vector<8x256xf32>
      tpu.vector_store %arg12[%c0_11, %c0_12], %12 {strides = array<i32>} : memref<8x256xf32, #tpu.memory_space<vmem>>, vector<8x256xf32>,
    } else {
    }
    %c0 = arith.constant 0 : index
    %c0_1 = arith.constant 0 : index
    %3 = vector.load %arg12[%c0, %c0_1] : memref<8x256xf32, #tpu.memory_space<vmem>>, vector<8x256xf32>
    %c0_2 = arith.constant 0 : index
    %c0_3 = arith.constant 0 : index
    %4 = vector.load %arg2[%c0_2, %c0_3] : memref<8x512xbf16, #tpu.memory_space<vmem>>, vector<8x512xbf16>
    %c0_4 = arith.constant 0 : index
    %c0_5 = arith.constant 0 : index
    %5 = vector.load %arg3[%c0_4, %c0_5] : memref<512x256xbf16, #tpu.memory_space<vmem>>, vector<512x256xbf16>
    %cst = arith.constant dense<0.000000e+00> : vector<8x256xf32>
    %6 = tpu.matmul %4, %5, %cst {dimension_numbers = #tpu.dot_dimension_numbers<[1], [0], [0], [1], [0, 0, 1, 1], [], []>} : vector<8x512xbf16>, vector<512x256xbf16>, vector<8x256xf32> -> vector<8x256xf32>
    %7 = arith.addf %3, %6 : vector<8x256xf32>
    %c0_6 = arith.constant 0 : index
    %c0_7 = arith.constant 0 : index
    %8 = vector.load %arg12[%c0_6, %c0_7] : memref<8x256xf32, #tpu.memory_space<vmem>>, vector<8x256xf32>
    tpu.vector_store %arg12[%c0_6, %c0_7], %7 {strides = array<i32>} : memref<8x256xf32, #tpu.memory_space<vmem>>, vector<8x256xf32>,
    %c0_i32_8 = arith.constant 0 : i32
    %9 = arith.cmpi eq, %arg1, %c0_i32_8 : i32
    %10 = arith.extui %9 : i1 to i32
    %c0_i32_9 = arith.constant 0 : i32
    %11 = arith.cmpi ne, %10, %c0_i32_9 : i32
    scf.if %11 {
      %c0_10 = arith.constant 0 : index
      %c0_11 = arith.constant 0 : index
      %12 = vector.load %arg12[%c0_10, %c0_11] : memref<8x256xf32, #tpu.memory_space<vmem>>, vector<8x256xf32>
      %c0_12 = arith.constant 0 : index
      %c0_13 = arith.constant 0 : index
      %13 = vector.load %arg4[%c0_12, %c0_13] : memref<1x256xf32, #tpu.memory_space<vmem>>, vector<1x256xf32>
      %14 = vector.broadcast %13 : vector<1x256xf32> to vector<8x256xf32>
      %15 = arith.addf %12, %14 : vector<8x256xf32>
      %cst_14 = arith.constant 0.000000e+00 : f32
      %16 = vector.broadcast %cst_14 : f32 to vector<8x256xf32>
      %17 = arith.cmpf oge, %15, %16 : vector<8x256xf32>
      %cst_15 = arith.constant 0.00999999977 : f32
      %18 = vector.broadcast %cst_15 : f32 to vector<8x256xf32>
      %19 = arith.mulf %18, %15 : vector<8x256xf32>
      %20 = arith.select %17, %15, %19 : vector<8x256xi1>, vector<8x256xf32>
      %21 = arith.truncf %20 : vector<8x256xf32> to vector<8x256xbf16>
      %c0_16 = arith.constant 0 : index
      %c0_17 = arith.constant 0 : index
      %22 = vector.load %arg5[%c0_16, %c0_17] : memref<256x128xbf16, #tpu.memory_space<vmem>>, vector<256x128xbf16>
      %cst_18 = arith.constant dense<0.000000e+00> : vector<8x128xf32>
      %23 = tpu.matmul %21, %22, %cst_18 {dimension_numbers = #tpu.dot_dimension_numbers<[1], [0], [0], [1], [0, 0, 1, 1], [], []>} : vector<8x256xbf16>, vector<256x128xbf16>, vector<8x128xf32> -> vector<8x128xf32>
      %c0_19 = arith.constant 0 : index
      %c0_20 = arith.constant 0 : index
      %24 = vector.load %arg6[%c0_19, %c0_20] : memref<1x128xf32, #tpu.memory_space<vmem>>, vector<1x128xf32>
      %25 = vector.broadcast %24 : vector<1x128xf32> to vector<8x128xf32>
      %26 = arith.addf %23, %25 : vector<8x128xf32>
      %cst_21 = arith.constant 0.000000e+00 : f32
      %27 = vector.broadcast %cst_21 : f32 to vector<8x128xf32>
      %28 = arith.cmpf oge, %26, %27 : vector<8x128xf32>
      %cst_22 = arith.constant 0.00999999977 : f32
      %29 = vector.broadcast %cst_22 : f32 to vector<8x128xf32>
      %30 = arith.mulf %29, %26 : vector<8x128xf32>
      %31 = arith.select %28, %26, %30 : vector<8x128xi1>, vector<8x128xf32>
      %32 = arith.truncf %31 : vector<8x128xf32> to vector<8x128xbf16>
      %c0_23 = arith.constant 0 : index
      %c0_24 = arith.constant 0 : index
      %33 = vector.load %arg7[%c0_23, %c0_24] : memref<128x16xbf16, #tpu.memory_space<vmem>>, vector<128x16xbf16>
      %cst_25 = arith.constant dense<0.000000e+00> : vector<8x16xf32>
      %34 = tpu.matmul %32, %33, %cst_25 {dimension_numbers = #tpu.dot_dimension_numbers<[1], [0], [0], [1], [0, 0, 1, 1], [], []>} : vector<8x128xbf16>, vector<128x16xbf16>, vector<8x16xf32> -> vector<8x16xf32>
      %c0_26 = arith.constant 0 : index
      %c0_27 = arith.constant 0 : index
      %35 = vector.load %arg8[%c0_26, %c0_27] : memref<1x16xf32, #tpu.memory_space<vmem>>, vector<1x16xf32>
      %36 = vector.broadcast %35 : vector<1x16xf32> to vector<8x16xf32>
      %37 = arith.addf %34, %36 : vector<8x16xf32>
      %cst_28 = arith.constant 0.000000e+00 : f32
      %38 = vector.broadcast %cst_28 : f32 to vector<8x16xf32>
      %39 = arith.cmpf oge, %37, %38 : vector<8x16xf32>
      %cst_29 = arith.constant 0.00999999977 : f32
      %40 = vector.broadcast %cst_29 : f32 to vector<8x16xf32>
      %41 = arith.mulf %40, %37 : vector<8x16xf32>
      %42 = arith.select %39, %37, %41 : vector<8x16xi1>, vector<8x16xf32>
      %43 = arith.truncf %42 : vector<8x16xf32> to vector<8x16xbf16>
      %c0_30 = arith.constant 0 : index
      %c0_31 = arith.constant 0 : index
      %44 = vector.load %arg9[%c0_30, %c0_31] : memref<16x128xbf16, #tpu.memory_space<vmem>>, vector<16x128xbf16>
      %cst_32 = arith.constant dense<0.000000e+00> : vector<8x128xf32>
      %45 = tpu.matmul %43, %44, %cst_32 {dimension_numbers = #tpu.dot_dimension_numbers<[1], [0], [0], [1], [0, 0, 1, 1], [], []>} : vector<8x16xbf16>, vector<16x128xbf16>, vector<8x128xf32> -> vector<8x128xf32>
      %c0_33 = arith.constant 0 : index
      %c0_34 = arith.constant 0 : index
      %46 = vector.load %arg10[%c0_33, %c0_34] : memref<1x128xf32, #tpu.memory_space<vmem>>, vector<1x128xf32>
      %47 = vector.broadcast %46 : vector<1x128xf32> to vector<8x128xf32>
      %48 = arith.addf %45, %47 : vector<8x128xf32>
      %c0_35 = arith.constant 0 : index
      %c0_36 = arith.constant 0 : index
      %49 = vector.load %arg11[%c0_35, %c0_36] : memref<8x128xf32, #tpu.memory_space<vmem>>, vector<8x128xf32>
      tpu.vector_store %arg11[%c0_35, %c0_36], %48 {strides = array<i32>} : memref<8x128xf32, #tpu.memory_space<vmem>>, vector<8x128xf32>,
    } else {
    }
    return
  }
  func.func @transform_0(%arg0: i32, %arg1: i32) -> (i32, i32) {
    %c0_i32 = arith.constant 0 : i32
    return %arg0, %arg1 : i32, i32
  }
  func.func @transform_1(%arg0: i32, %arg1: i32) -> (i32, i32) {
    %c0_i32 = arith.constant 0 : i32
    %c0_i32_0 = arith.constant 0 : i32
    return %arg1, %c0_i32 : i32, i32
  }
  func.func @transform_2(%arg0: i32, %arg1: i32) -> (i32, i32) {
    %c0_i32 = arith.constant 0 : i32
    %c0_i32_0 = arith.constant 0 : i32
    %c0_i32_1 = arith.constant 0 : i32
    return %c0_i32, %c0_i32_0 : i32, i32
  }
  func.func @transform_3(%arg0: i32, %arg1: i32) -> (i32, i32) {
    %c0_i32 = arith.constant 0 : i32
    %c0_i32_0 = arith.constant 0 : i32
    %c0_i32_1 = arith.constant 0 : i32
    return %c0_i32, %c0_i32_0 : i32, i32
  }
  func.func @transform_4(%arg0: i32, %arg1: i32) -> (i32, i32) {
    %c0_i32 = arith.constant 0 : i32
    %c0_i32_0 = arith.constant 0 : i32
    %c0_i32_1 = arith.constant 0 : i32
    return %c0_i32, %c0_i32_0 : i32, i32
  }
  func.func @transform_5(%arg0: i32, %arg1: i32) -> (i32, i32) {
    %c0_i32 = arith.constant 0 : i32
    %c0_i32_0 = arith.constant 0 : i32
    %c0_i32_1 = arith.constant 0 : i32
    return %c0_i32, %c0_i32_0 : i32, i32
  }
  func.func @transform_6(%arg0: i32, %arg1: i32) -> (i32, i32) {
    %c0_i32 = arith.constant 0 : i32
    %c0_i32_0 = arith.constant 0 : i32
    %c0_i32_1 = arith.constant 0 : i32
    return %c0_i32, %c0_i32_0 : i32, i32
  }
  func.func @transform_7(%arg0: i32, %arg1: i32) -> (i32, i32) {
    %c0_i32 = arith.constant 0 : i32
    %c0_i32_0 = arith.constant 0 : i32
    %c0_i32_1 = arith.constant 0 : i32
    return %c0_i32, %c0_i32_0 : i32, i32
  }
  func.func @transform_8(%arg0: i32, %arg1: i32) -> (i32, i32) {
    %c0_i32 = arith.constant 0 : i32
    %c0_i32_0 = arith.constant 0 : i32
    %c0_i32_1 = arith.constant 0 : i32
    return %c0_i32, %c0_i32_0 : i32, i32
  }
  func.func @transform_9(%arg0: i32, %arg1: i32) -> (i32, i32) {
    %c0_i32 = arith.constant 0 : i32
    %c0_i32_0 = arith.constant 0 : i32
    return %arg0, %c0_i32 : i32, i32
  }
}

</mosaic_0001>

<llo_original>
// kernel: tpu_custom_call.1
$region0: #{tpu_custom_call.1}
  #allocation0 [shape = 'u32[]', space=smem, size = 0x4, offset = 0x4, fixed_abs, tag = 'smem constant byte address 0x4 - core index']
  #allocation1 [shape = 'u32[72,128]{1,0:T(1,128)}', space=vmem, size = 0x9000, scoped, tag = 'internal scratch']
  #allocation2 [shape = 'f32[8,256]{1,0:T(8,128)}', space=vmem, size = 0x2000, scoped, tag = 'scratch operand']
  %s0 = inlined_call_operand.vmem [shape: bf16[8,512], index: 0, kind: input, shape index: {}]
  %s1 = inlined_call_operand.hbm [shape: bf16[512,256], index: 1, kind: input, shape index: {}]
  %s2 = inlined_call_operand.vmem [shape: f32[1,256], index: 2, kind: input, shape index: {}]
  %s3 = inlined_call_operand.hbm [shape: bf16[256,128], index: 3, kind: input, shape index: {}]
  %s4 = inlined_call_operand.vmem [shape: f32[1,128], index: 4, kind: input, shape index: {}]
  %s5 = inlined_call_operand.vmem [shape: bf16[128,16], index: 5, kind: input, shape index: {}]
  %s6 = inlined_call_operand.vmem [shape: f32[1,16], index: 6, kind: input, shape index: {}]
  %s7 = inlined_call_operand.vmem [shape: bf16[16,128], index: 7, kind: input, shape index: {}]
  %s8 = inlined_call_operand.vmem [shape: f32[1,128], index: 8, kind: input, shape index: {}]
  %s9 = inlined_call_operand.hbm [shape: f32[8,128], index: 9, kind: output, shape index: {}]
  %s10 = sld [smem:[#allocation0]]
  $region62: #{tpu_custom_call.1} parent=0
    _
  %s12 = ssub.s32 1, %s10
  %s13 = scalar_select 0, %s12, %s10
  $region1: #{tpu_custom_call.1} parent=0
    #allocation3 [shape = 'u8[262144]{0}', space=vmem, size = 0x40000, scoped, tag = 'input window, operand 1, single buffered']
    #allocation4 [shape = 's32[1]{0}', space=sflag, size = 0x4, scoped, tag = 'scoped memory for tpu_custom_call.1']
    #allocation5 [shape = 's32[1]{0}', space=sflag, size = 0x4, scoped, tag = 'scoped memory for tpu_custom_call.1']
    #allocation6 [shape = 'u8[65536]{0}', space=vmem, size = 0x10000, scoped, tag = 'input window, operand 3, single buffered']
    #allocation7 [shape = 's32[1]{0}', space=sflag, size = 0x4, scoped, tag = 'scoped memory for tpu_custom_call.1']
    #allocation8 [shape = 'u8[4096]{0}', space=vmem, size = 0x1000, scoped, tag = 'output window, operand 0, single buffered']
    %14 = vsyncpa [#allocation4], 0
    %15 = vsyncpa [#allocation7], 0
    %16 = vsyncpa [#allocation5], 0
    // Predicated region
    $region2: #{tpu_custom_call.1} parent=1 // pred_check
      _
    $region3: #{tpu_custom_call.1} parent=1 // pred_check_branch
      %18 = sbr.rel (0) target = $region5
    $region4: #{tpu_custom_call.1} parent=1 // pred_region
      _
    $region5: #{tpu_custom_call.1} parent=1 // pred_fallthru
      _
    // Predicated region
    $region6: #{tpu_custom_call.1} parent=1 // pred_check
      _
    $region7: #{tpu_custom_call.1} parent=1 // pred_check_branch
      %20 = sbr.rel (0) target = $region9
    $region8: #{tpu_custom_call.1} parent=1 // pred_region
      %22 = vsyncadd [#allocation4], 0
      %s23 = sshll.u32 %s1, 4
      %s24 = int_to_ptr.hbm [resolvable:$true] %s23
      %s25 = sshll.u32 [#allocation3], 4
      %s26 = int_to_ptr.vmem [resolvable:$true] %s25
      %31 = dma.hbm_to_vmem [thread:$0]  %s24, 8192, %s26, [#allocation4], 128, 128, 8
    $region9: #{tpu_custom_call.1} parent=1 // pred_fallthru
      _
    // Predicated region
    $region10: #{tpu_custom_call.1} parent=1 // pred_check
      _
    $region11: #{tpu_custom_call.1} parent=1 // pred_check_branch
      %33 = sbr.rel (0) target = $region13
    $region12: #{tpu_custom_call.1} parent=1 // pred_region
      _
    $region13: #{tpu_custom_call.1} parent=1 // pred_fallthru
      _
    // Predicated region
    $region14: #{tpu_custom_call.1} parent=1 // pred_check
      _
    $region15: #{tpu_custom_call.1} parent=1 // pred_check_branch
      %35 = sbr.rel (0) target = $region17
    $region16: #{tpu_custom_call.1} parent=1 // pred_region
      %37 = vsyncadd [#allocation7], 0
      %s38 = sshll.u32 %s3, 4
      %s39 = int_to_ptr.hbm [resolvable:$true] %s38
      %s40 = sshll.u32 [#allocation6], 4
      %s41 = int_to_ptr.vmem [resolvable:$true] %s40
      %46 = dma.hbm_to_vmem [thread:$0]  %s39, 2048, %s41, [#allocation7], 64, 64, 4
    $region17: #{tpu_custom_call.1} parent=1 // pred_fallthru
      _
    // Predicated region
    $region18: #{tpu_custom_call.1} parent=1 // pred_check
      _
    $region19: #{tpu_custom_call.1} parent=1 // pred_check_branch
      %48 = sbr.rel (0) target = $region21
    $region20: #{tpu_custom_call.1} parent=1 // pred_region
      _
    $region21: #{tpu_custom_call.1} parent=1 // pred_fallthru
      _
    // Predicated region
    $region22: #{tpu_custom_call.1} parent=1 // pred_check
      _
    $region23: #{tpu_custom_call.1} parent=1 // pred_check_branch
      %50 = sbr.rel (0) target = $region25
    $region24: #{tpu_custom_call.1} parent=1 // pred_region
      _
    $region25: #{tpu_custom_call.1} parent=1 // pred_fallthru
      _
    // Predicated region
    $region26: #{tpu_custom_call.1} parent=1 // pred_check
      _
    $region27: #{tpu_custom_call.1} parent=1 // pred_check_branch
      %52 = sbr.rel (0) target = $region29
    $region28: #{tpu_custom_call.1} parent=1 // pred_region
      _
    $region29: #{tpu_custom_call.1} parent=1 // pred_fallthru
      _
    // Predicated region
    $region30: #{tpu_custom_call.1} parent=1 // pred_check
      _
    $region31: #{tpu_custom_call.1} parent=1 // pred_check_branch
      %54 = sbr.rel (0) target = $region33
    $region32: #{tpu_custom_call.1} parent=1 // pred_region
      _
    $region33: #{tpu_custom_call.1} parent=1 // pred_fallthru
      _
    // Predicated region
    $region34: #{tpu_custom_call.1} parent=1 // pred_check
      _
    $region35: #{tpu_custom_call.1} parent=1 // pred_check_branch
      %56 = sbr.rel (0) target = $region37
    $region36: #{tpu_custom_call.1} parent=1 // pred_region
      _
    $region37: #{tpu_custom_call.1} parent=1 // pred_fallthru
      _
    // Predicated region
    $region38: #{tpu_custom_call.1} parent=1 // pred_check
      _
    $region39: #{tpu_custom_call.1} parent=1 // pred_check_branch
      %58 = sbr.rel (0) target = $region41
    $region40: #{tpu_custom_call.1} parent=1 // pred_region
      %60 = dma.done [#allocation4], 8192
    $region41: #{tpu_custom_call.1} parent=1 // pred_fallthru
      _
    // Predicated region
    $region42: #{tpu_custom_call.1} parent=1 // pred_check
      _
    $region43: #{tpu_custom_call.1} parent=1 // pred_check_branch
      %62 = sbr.rel (0) target = $region45
    $region44: #{tpu_custom_call.1} parent=1 // pred_region
      %64 = dma.done [#allocation7], 2048
    $region45: #{tpu_custom_call.1} parent=1 // pred_fallthru
      _
    %p66 = scmp.eq.s32.totalorder 0, 0
    // Predicated region
    $region46: #{tpu_custom_call.1} parent=1 // pred_check
      %p67 = pneg %p66
    $region47: #{tpu_custom_call.1} parent=1 // pred_check_branch
      %69 = sbr.rel (%p67) target = $region49
    $region48: #{tpu_custom_call.1} parent=1 // pred_region
      %70 = vst [vmem:[#allocation2] sm:$0xff] 0.0
      %71 = vst [vmem:[#allocation2 + $0x8] sm:$0xff] 0.0
    $region49: #{tpu_custom_call.1} parent=1 // pred_fallthru
      _
    %v72 = vld [vmem:[#allocation2] sm:$0xff]
    %v73 = vld [vmem:[#allocation2 + $0x8] sm:$0xff]
    %v74 = vld [vmem:[%s0] sm:$0xff]
    %v75 = vld [vmem:[%s0 + $0x8] sm:$0xff]
    %v76 = vld [vmem:[#allocation3] sm:$0xff]
    %v77 = vld [vmem:[#allocation3 + $0x8] sm:$0xff]
    %v78 = vld [vmem:[#allocation3 + $0x10] sm:$0xff]
    %v79 = vld [vmem:[#allocation3 + $0x18] sm:$0xff]
    %v80 = vld [vmem:[#allocation3 + $0x20] sm:$0xff]
    %v81 = vld [vmem:[#allocation3 + $0x28] sm:$0xff]
    %v82 = vld [vmem:[#allocation3 + $0x30] sm:$0xff]
    %v83 = vld [vmem:[#allocation3 + $0x38] sm:$0xff]
    %v84 = vld [vmem:[#allocation3 + $0x40] sm:$0xff]
    %v85 = vld [vmem:[#allocation3 + $0x48] sm:$0xff]
    %v86 = vld [vmem:[#allocation3 + $0x50] sm:$0xff]
    %v87 = vld [vmem:[#allocation3 + $0x58] sm:$0xff]
    %v88 = vld [vmem:[#allocation3 + $0x60] sm:$0xff]
    %v89 = vld [vmem:[#allocation3 + $0x68] sm:$0xff]
    %v90 = vld [vmem:[#allocation3 + $0x70] sm:$0xff]
    %v91 = vld [vmem:[#allocation3 + $0x78] sm:$0xff]
    %v92 = vld [vmem:[#allocation3 + $0x80] sm:$0xff]
    %v93 = vld [vmem:[#allocation3 + $0x88] sm:$0xff]
    %v94 = vld [vmem:[#allocation3 + $0x90] sm:$0xff]
    %v95 = vld [vmem:[#allocation3 + $0x98] sm:$0xff]
    %v96 = vld [vmem:[#allocation3 + $0xa0] sm:$0xff]
    %v97 = vld [vmem:[#allocation3 + $0xa8] sm:$0xff]
    %v98 = vld [vmem:[#allocation3 + $0xb0] sm:$0xff]
    %v99 = vld [vmem:[#allocation3 + $0xb8] sm:$0xff]
    %v100 = vld [vmem:[#allocation3 + $0xc0] sm:$0xff]
    %v101 = vld [vmem:[#allocation3 + $0xc8] sm:$0xff]
    %v102 = vld [vmem:[#allocation3 + $0xd0] sm:$0xff]
    %v103 = vld [vmem:[#allocation3 + $0xd8] sm:$0xff]
    %v104 = vld [vmem:[#allocation3 + $0xe0] sm:$0xff]
    %v105 = vld [vmem:[#allocation3 + $0xe8] sm:$0xff]
    %v106 = vld [vmem:[#allocation3 + $0xf0] sm:$0xff]
    %v107 = vld [vmem:[#allocation3 + $0xf8] sm:$0xff]
    %v108 = vld [vmem:[#allocation3 + $0x100] sm:$0xff]
    %v109 = vld [vmem:[#allocation3 + $0x108] sm:$0xff]
    %v110 = vld [vmem:[#allocation3 + $0x110] sm:$0xff]
    %v111 = vld [vmem:[#allocation3 + $0x118] sm:$0xff]
    %v112 = vld [vmem:[#allocation3 + $0x120] sm:$0xff]
    %v113 = vld [vmem:[#allocation3 + $0x128] sm:$0xff]
    %v114 = vld [vmem:[#allocation3 + $0x130] sm:$0xff]
    %v115 = vld [vmem:[#allocation3 + $0x138] sm:$0xff]
    %v116 = vld [vmem:[#allocation3 + $0x140] sm:$0xff]
    %v117 = vld [vmem:[#allocation3 + $0x148] sm:$0xff]
    %v118 = vld [vmem:[#allocation3 + $0x150] sm:$0xff]
    %v119 = vld [vmem:[#allocation3 + $0x158] sm:$0xff]
    %v120 = vld [vmem:[#allocation3 + $0x160] sm:$0xff]
    %v121 = vld [vmem:[#allocation3 + $0x168] sm:$0xff]
    %v122 = vld [vmem:[#allocation3 + $0x170] sm:$0xff]
    %v123 = vld [vmem:[#allocation3 + $0x178] sm:$0xff]
    %v124 = vld [vmem:[#allocation3 + $0x180] sm:$0xff]
    %v125 = vld [vmem:[#allocation3 + $0x188] sm:$0xff]
    %v126 = vld [vmem:[#allocation3 + $0x190] sm:$0xff]
    %v127 = vld [vmem:[#allocation3 + $0x198] sm:$0xff]
    %v128 = vld [vmem:[#allocation3 + $0x1a0] sm:$0xff]
    %v129 = vld [vmem:[#allocation3 + $0x1a8] sm:$0xff]
    %v130 = vld [vmem:[#allocation3 + $0x1b0] sm:$0xff]
    %v131 = vld [vmem:[#allocation3 + $0x1b8] sm:$0xff]
    %v132 = vld [vmem:[#allocation3 + $0x1c0] sm:$0xff]
    %v133 = vld [vmem:[#allocation3 + $0x1c8] sm:$0xff]
    %v134 = vld [vmem:[#allocation3 + $0x1d0] sm:$0xff]
    %v135 = vld [vmem:[#allocation3 + $0x1d8] sm:$0xff]
    %v136 = vld [vmem:[#allocation3 + $0x1e0] sm:$0xff]
    %v137 = vld [vmem:[#allocation3 + $0x1e8] sm:$0xff]
    %v138 = vld [vmem:[#allocation3 + $0x1f0] sm:$0xff]
    %v139 = vld [vmem:[#allocation3 + $0x1f8] sm:$0xff]
    %v142 = vunpack.c.l.b16 %v74
    %v143 = vunpack.c.h.b16 %v74
    %v144 = vunpack.c.l.b16 %v75
    %v145 = vunpack.c.h.b16 %v75
    %v146 = vpack.c.b16 %v142, %v142
    %v147 = vpack.c.b16 %v143, %v143
    %v148 = vpack.c.b16 %v144, %v144
    %v149 = vpack.c.b16 %v145, %v145
    %v218 = vunpack.c.l.b16 %v76
    %v219 = vunpack.c.h.b16 %v76
    %v220 = vunpack.c.l.b16 %v77
    %v221 = vunpack.c.h.b16 %v77
    %v222 = vunpack.c.l.b16 %v78
    %v223 = vunpack.c.h.b16 %v78
    %v224 = vunpack.c.l.b16 %v79
    %v225 = vunpack.c.h.b16 %v79
    %v226 = vunpack.c.l.b16 %v80
    %v227 = vunpack.c.h.b16 %v80
    %v228 = vunpack.c.l.b16 %v81
    %v229 = vunpack.c.h.b16 %v81
    %v230 = vunpack.c.l.b16 %v82
    %v231 = vunpack.c.h.b16 %v82
    %v232 = vunpack.c.l.b16 %v83
    %v233 = vunpack.c.h.b16 %v83
    %v234 = vunpack.c.l.b16 %v84
    %v235 = vunpack.c.h.b16 %v84
    %v236 = vunpack.c.l.b16 %v85
    %v237 = vunpack.c.h.b16 %v85
    %v238 = vunpack.c.l.b16 %v86
    %v239 = vunpack.c.h.b16 %v86
    %v240 = vunpack.c.l.b16 %v87
    %v241 = vunpack.c.h.b16 %v87
    %v242 = vunpack.c.l.b16 %v88
    %v243 = vunpack.c.h.b16 %v88
    %v244 = vunpack.c.l.b16 %v89
    %v245 = vunpack.c.h.b16 %v89
    %v246 = vunpack.c.l.b16 %v90
    %v247 = vunpack.c.h.b16 %v90
    %v248 = vunpack.c.l.b16 %v91
    %v249 = vunpack.c.h.b16 %v91
    %v250 = vunpack.c.l.b16 %v92
    %v251 = vunpack.c.h.b16 %v92
    %v252 = vunpack.c.l.b16 %v93
    %v253 = vunpack.c.h.b16 %v93
    %v254 = vunpack.c.l.b16 %v94
    %v255 = vunpack.c.h.b16 %v94
    %v256 = vunpack.c.l.b16 %v95
    %v257 = vunpack.c.h.b16 %v95
    %v258 = vunpack.c.l.b16 %v96
    %v259 = vunpack.c.h.b16 %v96
    %v260 = vunpack.c.l.b16 %v97
    %v261 = vunpack.c.h.b16 %v97
    %v262 = vunpack.c.l.b16 %v98
    %v263 = vunpack.c.h.b16 %v98
    %v264 = vunpack.c.l.b16 %v99
    %v265 = vunpack.c.h.b16 %v99
    %v266 = vunpack.c.l.b16 %v100
    %v267 = vunpack.c.h.b16 %v100
    %v268 = vunpack.c.l.b16 %v101
    %v269 = vunpack.c.h.b16 %v101
    %v270 = vunpack.c.l.b16 %v102
    %v271 = vunpack.c.h.b16 %v102
    %v272 = vunpack.c.l.b16 %v103
    %v273 = vunpack.c.h.b16 %v103
    %v274 = vunpack.c.l.b16 %v104
    %v275 = vunpack.c.h.b16 %v104
    %v276 = vunpack.c.l.b16 %v105
    %v277 = vunpack.c.h.b16 %v105
    %v278 = vunpack.c.l.b16 %v106
    %v279 = vunpack.c.h.b16 %v106
    %v280 = vunpack.c.l.b16 %v107
    %v281 = vunpack.c.h.b16 %v107
    %v282 = vunpack.c.l.b16 %v108
    %v283 = vunpack.c.h.b16 %v108
    %v284 = vunpack.c.l.b16 %v109
    %v285 = vunpack.c.h.b16 %v109
    %v286 = vunpack.c.l.b16 %v110
    %v287 = vunpack.c.h.b16 %v110
    %v288 = vunpack.c.l.b16 %v111
    %v289 = vunpack.c.h.b16 %v111
    %v290 = vunpack.c.l.b16 %v112
    %v291 = vunpack.c.h.b16 %v112
    %v292 = vunpack.c.l.b16 %v113
    %v293 = vunpack.c.h.b16 %v113
    %v294 = vunpack.c.l.b16 %v114
    %v295 = vunpack.c.h.b16 %v114
    %v296 = vunpack.c.l.b16 %v115
    %v297 = vunpack.c.h.b16 %v115
    %v298 = vunpack.c.l.b16 %v116
    %v299 = vunpack.c.h.b16 %v116
    %v300 = vunpack.c.l.b16 %v117
    %v301 = vunpack.c.h.b16 %v117
    %v302 = vunpack.c.l.b16 %v118
    %v303 = vunpack.c.h.b16 %v118
    %v304 = vunpack.c.l.b16 %v119
    %v305 = vunpack.c.h.b16 %v119
    %v306 = vunpack.c.l.b16 %v120
    %v307 = vunpack.c.h.b16 %v120
    %v308 = vunpack.c.l.b16 %v121
    %v309 = vunpack.c.h.b16 %v121
    %v310 = vunpack.c.l.b16 %v122
    %v311 = vunpack.c.h.b16 %v122
    %v312 = vunpack.c.l.b16 %v123
    %v313 = vunpack.c.h.b16 %v123
    %v314 = vunpack.c.l.b16 %v124
    %v315 = vunpack.c.h.b16 %v124
    %v316 = vunpack.c.l.b16 %v125
    %v317 = vunpack.c.h.b16 %v125
    %v318 = vunpack.c.l.b16 %v126
    %v319 = vunpack.c.h.b16 %v126
    %v320 = vunpack.c.l.b16 %v127
    %v321 = vunpack.c.h.b16 %v127
    %v322 = vunpack.c.l.b16 %v128
    %v323 = vunpack.c.h.b16 %v128
    %v324 = vunpack.c.l.b16 %v129
    %v325 = vunpack.c.h.b16 %v129
    %v326 = vunpack.c.l.b16 %v130
    %v327 = vunpack.c.h.b16 %v130
    %v328 = vunpack.c.l.b16 %v131
    %v329 = vunpack.c.h.b16 %v131
    %v330 = vunpack.c.l.b16 %v132
    %v331 = vunpack.c.h.b16 %v132
    %v332 = vunpack.c.l.b16 %v133
    %v333 = vunpack.c.h.b16 %v133
    %v334 = vunpack.c.l.b16 %v134
    %v335 = vunpack.c.h.b16 %v134
    %v336 = vunpack.c.l.b16 %v135
    %v337 = vunpack.c.h.b16 %v135
    %v338 = vunpack.c.l.b16 %v136
    %v339 = vunpack.c.h.b16 %v136
    %v340 = vunpack.c.l.b16 %v137
    %v341 = vunpack.c.h.b16 %v137
    %v342 = vunpack.c.l.b16 %v138
    %v343 = vunpack.c.h.b16 %v138
    %v344 = vunpack.c.l.b16 %v139
    %v345 = vunpack.c.h.b16 %v139
    %v346 = vpack.c.b16 %v220, %v218
    %v347 = vpack.c.b16 %v221, %v219
    %v348 = vpack.c.b16 %v224, %v222
    %v349 = vpack.c.b16 %v225, %v223
    %v350 = vpack.c.b16 %v228, %v226
    %v351 = vpack.c.b16 %v229, %v227
    %v352 = vpack.c.b16 %v232, %v230
    %v353 = vpack.c.b16 %v233, %v231
    %v354 = vpack.c.b16 %v236, %v234
    %v355 = vpack.c.b16 %v237, %v235
    %v356 = vpack.c.b16 %v240, %v238
    %v357 = vpack.c.b16 %v241, %v239
    %v358 = vpack.c.b16 %v244, %v242
    %v359 = vpack.c.b16 %v245, %v243
    %v360 = vpack.c.b16 %v248, %v246
    %v361 = vpack.c.b16 %v249, %v247
    %v362 = vpack.c.b16 %v252, %v250
    %v363 = vpack.c.b16 %v253, %v251
    %v364 = vpack.c.b16 %v256, %v254
    %v365 = vpack.c.b16 %v257, %v255
    %v366 = vpack.c.b16 %v260, %v258
    %v367 = vpack.c.b16 %v261, %v259
    %v368 = vpack.c.b16 %v264, %v262
    %v369 = vpack.c.b16 %v265, %v263
    %v370 = vpack.c.b16 %v268, %v266
    %v371 = vpack.c.b16 %v269, %v267
    %v372 = vpack.c.b16 %v272, %v270
    %v373 = vpack.c.b16 %v273, %v271
    %v374 = vpack.c.b16 %v276, %v274
    %v375 = vpack.c.b16 %v277, %v275
    %v376 = vpack.c.b16 %v280, %v278
    %v377 = vpack.c.b16 %v281, %v279
    %v378 = vpack.c.b16 %v284, %v282
    %v379 = vpack.c.b16 %v285, %v283
    %v380 = vpack.c.b16 %v288, %v286
    %v381 = vpack.c.b16 %v289, %v287
    %v382 = vpack.c.b16 %v292, %v290
    %v383 = vpack.c.b16 %v293, %v291
    %v384 = vpack.c.b16 %v296, %v294
    %v385 = vpack.c.b16 %v297, %v295
    %v386 = vpack.c.b16 %v300, %v298
    %v387 = vpack.c.b16 %v301, %v299
    %v388 = vpack.c.b16 %v304, %v302
    %v389 = vpack.c.b16 %v305, %v303
    %v390 = vpack.c.b16 %v308, %v306
    %v391 = vpack.c.b16 %v309, %v307
    %v392 = vpack.c.b16 %v312, %v310
    %v393 = vpack.c.b16 %v313, %v311
    %v394 = vpack.c.b16 %v316, %v314
    %v395 = vpack.c.b16 %v317, %v315
    %v396 = vpack.c.b16 %v320, %v318
    %v397 = vpack.c.b16 %v321, %v319
    %v398 = vpack.c.b16 %v324, %v322
    %v399 = vpack.c.b16 %v325, %v323
    %v400 = vpack.c.b16 %v328, %v326
    %v401 = vpack.c.b16 %v329, %v327
    %v402 = vpack.c.b16 %v332, %v330
    %v403 = vpack.c.b16 %v333, %v331
    %v404 = vpack.c.b16 %v336, %v334
    %v405 = vpack.c.b16 %v337, %v335
    %v406 = vpack.c.b16 %v340, %v338
    %v407 = vpack.c.b16 %v341, %v339
    %v408 = vpack.c.b16 %v344, %v342
    %v409 = vpack.c.b16 %v345, %v343
    %474 = vmatpush.bf16.msra.mxu0 %v360
    %475 = vmatpush.bf16.msra.mxu0 %v358
    %476 = vmatpush.bf16.msra.mxu0 %v356
    %477 = vmatpush.bf16.msra.mxu0 %v354
    %478 = vmatpush.bf16.msra.mxu0 %v352
    %479 = vmatpush.bf16.msra.mxu0 %v350
    %480 = vmatpush.bf16.msra.mxu0 %v348
    %481 = vmatpush.bf16.msra.mxu0 %v346
    %482 = vmatmul.bf16.gmra.mxu0 %v146
    %v483 = vpop.f32.mrf.mxu0
    %v484 = vadd.f32 0.0, %v483
    %v485 = vpop.f32.mrf.mxu0
    %486 = vdwg.mxu0
    %487 = vmatpush.bf16.msra.mxu0 %v376
    %488 = vmatpush.bf16.msra.mxu0 %v374
    %489 = vmatpush.bf16.msra.mxu0 %v372
    %490 = vmatpush.bf16.msra.mxu0 %v370
    %491 = vmatpush.bf16.msra.mxu0 %v368
    %492 = vmatpush.bf16.msra.mxu0 %v366
    %493 = vmatpush.bf16.msra.mxu0 %v364
    %494 = vmatpush.bf16.msra.mxu0 %v362
    %495 = vmatmul.bf16.gmra.mxu0 %v147
    %v496 = vpop.f32.mrf.mxu0
    %v497 = vadd.f32 %v484, %v496
    %v498 = vpop.f32.mrf.mxu0
    %499 = vdwg.mxu0
    %500 = vmatpush.bf16.msra.mxu0 %v392
    %501 = vmatpush.bf16.msra.mxu0 %v390
    %502 = vmatpush.bf16.msra.mxu0 %v388
    %503 = vmatpush.bf16.msra.mxu0 %v386
    %504 = vmatpush.bf16.msra.mxu0 %v384
    %505 = vmatpush.bf16.msra.mxu0 %v382
    %506 = vmatpush.bf16.msra.mxu0 %v380
    %507 = vmatpush.bf16.msra.mxu0 %v378
    %508 = vmatmul.bf16.gmra.mxu0 %v148
    %v509 = vpop.f32.mrf.mxu0
    %v510 = vadd.f32 %v497, %v509
    %v511 = vpop.f32.mrf.mxu0
    %512 = vdwg.mxu0
    %513 = vmatpush.bf16.msra.mxu0 %v408
    %514 = vmatpush.bf16.msra.mxu0 %v406
    %515 = vmatpush.bf16.msra.mxu0 %v404
    %516 = vmatpush.bf16.msra.mxu0 %v402
    %517 = vmatpush.bf16.msra.mxu0 %v400
    %518 = vmatpush.bf16.msra.mxu0 %v398
    %519 = vmatpush.bf16.msra.mxu0 %v396
    %520 = vmatpush.bf16.msra.mxu0 %v394
    %521 = vmatmul.bf16.gmra.mxu0 %v149
    %v522 = vpop.f32.mrf.mxu0
    %v523 = vadd.f32 %v510, %v522
    %v524 = vpop.f32.mrf.mxu0
    %525 = vdwg.mxu0
    %526 = vmatpush.bf16.msra.mxu0 %v361
    %527 = vmatpush.bf16.msra.mxu0 %v359
    %528 = vmatpush.bf16.msra.mxu0 %v357
    %529 = vmatpush.bf16.msra.mxu0 %v355
    %530 = vmatpush.bf16.msra.mxu0 %v353
    %531 = vmatpush.bf16.msra.mxu0 %v351
    %532 = vmatpush.bf16.msra.mxu0 %v349
    %533 = vmatpush.bf16.msra.mxu0 %v347
    %534 = vmatmul.bf16.gmra.mxu0 %v146
    %v535 = vpop.f32.mrf.mxu0
    %v536 = vadd.f32 0.0, %v535
    %v537 = vpop.f32.mrf.mxu0
    %538 = vdwg.mxu0
    %539 = vmatpush.bf16.msra.mxu0 %v377
    %540 = vmatpush.bf16.msra.mxu0 %v375
    %541 = vmatpush.bf16.msra.mxu0 %v373
    %542 = vmatpush.bf16.msra.mxu0 %v371
    %543 = vmatpush.bf16.msra.mxu0 %v369
    %544 = vmatpush.bf16.msra.mxu0 %v367
    %545 = vmatpush.bf16.msra.mxu0 %v365
    %546 = vmatpush.bf16.msra.mxu0 %v363
    %547 = vmatmul.bf16.gmra.mxu0 %v147
    %v548 = vpop.f32.mrf.mxu0
    %v549 = vadd.f32 %v536, %v548
    %v550 = vpop.f32.mrf.mxu0
    %551 = vdwg.mxu0
    %552 = vmatpush.bf16.msra.mxu0 %v393
    %553 = vmatpush.bf16.msra.mxu0 %v391
    %554 = vmatpush.bf16.msra.mxu0 %v389
    %555 = vmatpush.bf16.msra.mxu0 %v387
    %556 = vmatpush.bf16.msra.mxu0 %v385
    %557 = vmatpush.bf16.msra.mxu0 %v383
    %558 = vmatpush.bf16.msra.mxu0 %v381
    %559 = vmatpush.bf16.msra.mxu0 %v379
    %560 = vmatmul.bf16.gmra.mxu0 %v148
    %v561 = vpop.f32.mrf.mxu0
    %v562 = vadd.f32 %v549, %v561
    %v563 = vpop.f32.mrf.mxu0
    %564 = vdwg.mxu0
    %565 = vmatpush.bf16.msra.mxu0 %v409
    %566 = vmatpush.bf16.msra.mxu0 %v407
    %567 = vmatpush.bf16.msra.mxu0 %v405
    %568 = vmatpush.bf16.msra.mxu0 %v403
    %569 = vmatpush.bf16.msra.mxu0 %v401
    %570 = vmatpush.bf16.msra.mxu0 %v399
    %571 = vmatpush.bf16.msra.mxu0 %v397
    %572 = vmatpush.bf16.msra.mxu0 %v395
    %573 = vmatmul.bf16.gmra.mxu0 %v149
    %v574 = vpop.f32.mrf.mxu0
    %v575 = vadd.f32 %v562, %v574
    %v576 = vpop.f32.mrf.mxu0
    %577 = vdwg.mxu0
    %v578 = vadd.f32 %v72, %v523
    %v579 = vadd.f32 %v73, %v575
    %580 = vst [vmem:[#allocation2] sm:$0xff] %v578
    %581 = vst [vmem:[#allocation2 + $0x8] sm:$0xff] %v579
    // Predicated region
    $region50: #{tpu_custom_call.1} parent=1 // pred_check
      %p582 = pneg %p66
    $region51: #{tpu_custom_call.1} parent=1 // pred_check_branch
      %584 = sbr.rel (%p582) target = $region53
    $region52: #{tpu_custom_call.1} parent=1 // pred_region
      %v585 = vld [vmem:[#allocation2] sm:$0xff]
      %v586 = vld [vmem:[#allocation2 + $0x8] sm:$0xff]
      %v587 = vld [vmem:[%s2] sm:$0x3]
      %v589 = vperm.slane %v587, 0
      %v590 = vperm.slane %v587, 1
      %v593 = vadd.f32 %v585, %v589
      %v594 = vadd.f32 %v586, %v590
      %vm595 = vcmp.ge.f32.partialorder %v593, 0.0
      %vm596 = vcmp.ge.f32.partialorder %v594, 0.0
      %v597 = vmul.f32 %v593, 0.01
      %v598 = vmul.f32 %v594, 0.01
      %v599 = vsel %vm595, %v593, %v597
      %v600 = vsel %vm596, %v594, %v598
      %v601 = vpack.c.bf16 %v599, %v599
      %v602 = vpack.c.bf16 %v600, %v600
      %v603 = vld [vmem:[#allocation6] sm:$0xf]
      %v604 = vld [vmem:[#allocation6 + $0x4] sm:$0xf]
      %v605 = vld [vmem:[#allocation6 + $0x8] sm:$0xf]
      %v606 = vld [vmem:[#allocation6 + $0xc] sm:$0xf]
      %v607 = vld [vmem:[#allocation6 + $0x10] sm:$0xf]
      %v608 = vld [vmem:[#allocation6 + $0x14] sm:$0xf]
      %v609 = vld [vmem:[#allocation6 + $0x18] sm:$0xf]
      %v610 = vld [vmem:[#allocation6 + $0x1c] sm:$0xf]
      %v611 = vld [vmem:[#allocation6 + $0x20] sm:$0xf]
      %v612 = vld [vmem:[#allocation6 + $0x24] sm:$0xf]
      %v613 = vld [vmem:[#allocation6 + $0x28] sm:$0xf]
      %v614 = vld [vmem:[#allocation6 + $0x2c] sm:$0xf]
      %v615 = vld [vmem:[#allocation6 + $0x30] sm:$0xf]
      %v616 = vld [vmem:[#allocation6 + $0x34] sm:$0xf]
      %v617 = vld [vmem:[#allocation6 + $0x38] sm:$0xf]
      %v618 = vld [vmem:[#allocation6 + $0x3c] sm:$0xf]
      %v619 = vld [vmem:[#allocation6 + $0x40] sm:$0xf]
      %v620 = vld [vmem:[#allocation6 + $0x44] sm:$0xf]
      %v621 = vld [vmem:[#allocation6 + $0x48] sm:$0xf]
      %v622 = vld [vmem:[#allocation6 + $0x4c] sm:$0xf]
      %v623 = vld [vmem:[#allocation6 + $0x50] sm:$0xf]
      %v624 = vld [vmem:[#allocation6 + $0x54] sm:$0xf]
      %v625 = vld [vmem:[#allocation6 + $0x58] sm:$0xf]
      %v626 = vld [vmem:[#allocation6 + $0x5c] sm:$0xf]
      %v627 = vld [vmem:[#allocation6 + $0x60] sm:$0xf]
      %v628 = vld [vmem:[#allocation6 + $0x64] sm:$0xf]
      %v629 = vld [vmem:[#allocation6 + $0x68] sm:$0xf]
      %v630 = vld [vmem:[#allocation6 + $0x6c] sm:$0xf]
      %v631 = vld [vmem:[#allocation6 + $0x70] sm:$0xf]
      %v632 = vld [vmem:[#allocation6 + $0x74] sm:$0xf]
      %v633 = vld [vmem:[#allocation6 + $0x78] sm:$0xf]
      %v634 = vld [vmem:[#allocation6 + $0x7c] sm:$0xf]
      %v635 = vld [vmem:[%s4] sm:$0x1]
      %v637 = vperm.slane %v635, 0
      %v671 = vunpack.c.l.b16 %v603
      %v672 = vunpack.c.l.b16 %v604
      %v673 = vunpack.c.l.b16 %v605
      %v674 = vunpack.c.l.b16 %v606
      %v675 = vunpack.c.l.b16 %v607
      %v676 = vunpack.c.l.b16 %v608
      %v677 = vunpack.c.l.b16 %v609
      %v678 = vunpack.c.l.b16 %v610
      %v679 = vunpack.c.l.b16 %v611
      %v680 = vunpack.c.l.b16 %v612
      %v681 = vunpack.c.l.b16 %v613
      %v682 = vunpack.c.l.b16 %v614
      %v683 = vunpack.c.l.b16 %v615
      %v684 = vunpack.c.l.b16 %v616
      %v685 = vunpack.c.l.b16 %v617
      %v686 = vunpack.c.l.b16 %v618
      %v687 = vunpack.c.l.b16 %v619
      %v688 = vunpack.c.l.b16 %v620
      %v689 = vunpack.c.l.b16 %v621
      %v690 = vunpack.c.l.b16 %v622
      %v691 = vunpack.c.l.b16 %v623
      %v692 = vunpack.c.l.b16 %v624
      %v693 = vunpack.c.l.b16 %v625
      %v694 = vunpack.c.l.b16 %v626
      %v695 = vunpack.c.l.b16 %v627
      %v696 = vunpack.c.l.b16 %v628
      %v697 = vunpack.c.l.b16 %v629
      %v698 = vunpack.c.l.b16 %v630
      %v699 = vunpack.c.l.b16 %v631
      %v700 = vunpack.c.l.b16 %v632
      %v701 = vunpack.c.l.b16 %v633
      %v702 = vunpack.c.l.b16 %v634
      %v703 = vpack.c.b16 %v672, %v671
      %v704 = vpack.c.b16 %v674, %v673
      %v705 = vpack.c.b16 %v676, %v675
      %v706 = vpack.c.b16 %v678, %v677
      %v707 = vpack.c.b16 %v680, %v679
      %v708 = vpack.c.b16 %v682, %v681
      %v709 = vpack.c.b16 %v684, %v683
      %v710 = vpack.c.b16 %v686, %v685
      %v711 = vpack.c.b16 %v688, %v687
      %v712 = vpack.c.b16 %v690, %v689
      %v713 = vpack.c.b16 %v692, %v691
      %v714 = vpack.c.b16 %v694, %v693
      %v715 = vpack.c.b16 %v696, %v695
      %v716 = vpack.c.b16 %v698, %v697
      %v717 = vpack.c.b16 %v700, %v699
      %v718 = vpack.c.b16 %v702, %v701
      %735 = vmatpush.bf16.msra.mxu0 %v710
      %736 = vmatpush.bf16.msra.mxu0 %v709
      %737 = vmatpush.bf16.msra.mxu0 %v708
      %738 = vmatpush.bf16.msra.mxu0 %v707
      %739 = vmatpush.bf16.msra.mxu0 %v706
      %740 = vmatpush.bf16.msra.mxu0 %v705
      %741 = vmatpush.bf16.msra.mxu0 %v704
      %742 = vmatpush.bf16.msra.mxu0 %v703
      %743 = vmatmul.bf16.gmra.mxu0 %v601
      %v744 = vpop.f32.mrf.mxu0
      %v745 = vadd.f32 %v637, %v744
      %v746 = vpop.f32.mrf.mxu0
      %747 = vdwg.mxu0
      %748 = vmatpush.bf16.msra.mxu0 %v718
      %749 = vmatpush.bf16.msra.mxu0 %v717
      %750 = vmatpush.bf16.msra.mxu0 %v716
      %751 = vmatpush.bf16.msra.mxu0 %v715
      %752 = vmatpush.bf16.msra.mxu0 %v714
      %753 = vmatpush.bf16.msra.mxu0 %v713
      %754 = vmatpush.bf16.msra.mxu0 %v712
      %755 = vmatpush.bf16.msra.mxu0 %v711
      %756 = vmatmul.bf16.gmra.mxu0 %v602
      %v757 = vpop.f32.mrf.mxu0
      %v758 = vadd.f32 %v745, %v757
      %v759 = vpop.f32.mrf.mxu0
      %760 = vdwg.mxu0
      %vm761 = vcmp.ge.f32.partialorder %v758, 0.0
      %v762 = vmul.f32 %v758, 0.01
      %v763 = vsel %vm761, %v758, %v762
      %v764 = vpack.c.bf16 %v763, %v763
      %v765 = vld [vmem:[%s5] sm:$0xf]
      %v766 = vld [vmem:[%s5 + $0x4] sm:$0xf]
      %v767 = vld [vmem:[%s5 + $0x8] sm:$0xf]
      %v768 = vld [vmem:[%s5 + $0xc] sm:$0xf]
      %v769 = vld [vmem:[%s5 + $0x10] sm:$0xf]
      %v770 = vld [vmem:[%s5 + $0x14] sm:$0xf]
      %v771 = vld [vmem:[%s5 + $0x18] sm:$0xf]
      %v772 = vld [vmem:[%s5 + $0x1c] sm:$0xf]
      %v773 = vld [vmem:[%s5 + $0x20] sm:$0xf]
      %v774 = vld [vmem:[%s5 + $0x24] sm:$0xf]
      %v775 = vld [vmem:[%s5 + $0x28] sm:$0xf]
      %v776 = vld [vmem:[%s5 + $0x2c] sm:$0xf]
      %v777 = vld [vmem:[%s5 + $0x30] sm:$0xf]
      %v778 = vld [vmem:[%s5 + $0x34] sm:$0xf]
      %v779 = vld [vmem:[%s5 + $0x38] sm:$0xf]
      %v780 = vld [vmem:[%s5 + $0x3c] sm:$0xf]
      %v781 = vld [vmem:[%s6] sm:$0x1]
      %v783 = vperm.slane %v781, 0
      %v801 = vunpack.c.l.b16 %v765
      %v802 = vunpack.c.l.b16 %v766
      %v803 = vunpack.c.l.b16 %v767
      %v804 = vunpack.c.l.b16 %v768
      %v805 = vunpack.c.l.b16 %v769
      %v806 = vunpack.c.l.b16 %v770
      %v807 = vunpack.c.l.b16 %v771
      %v808 = vunpack.c.l.b16 %v772
      %v809 = vunpack.c.l.b16 %v773
      %v810 = vunpack.c.l.b16 %v774
      %v811 = vunpack.c.l.b16 %v775
      %v812 = vunpack.c.l.b16 %v776
      %v813 = vunpack.c.l.b16 %v777
      %v814 = vunpack.c.l.b16 %v778
      %v815 = vunpack.c.l.b16 %v779
      %v816 = vunpack.c.l.b16 %v780
      %v817 = vpack.c.b16 %v802, %v801
      %v818 = vpack.c.b16 %v804, %v803
      %v819 = vpack.c.b16 %v806, %v805
      %v820 = vpack.c.b16 %v808, %v807
      %v821 = vpack.c.b16 %v810, %v809
      %v822 = vpack.c.b16 %v812, %v811
      %v823 = vpack.c.b16 %v814, %v813
      %v824 = vpack.c.b16 %v816, %v815
      %833 = vmatpush.bf16.msra.mxu0 %v824
      %834 = vmatpush.bf16.msra.mxu0 %v823
      %835 = vmatpush.bf16.msra.mxu0 %v822
      %836 = vmatpush.bf16.msra.mxu0 %v821
      %837 = vmatpush.bf16.msra.mxu0 %v820
      %838 = vmatpush.bf16.msra.mxu0 %v819
      %839 = vmatpush.bf16.msra.mxu0 %v818
      %840 = vmatpush.bf16.msra.mxu0 %v817
      %841 = vmatmul.bf16.gmra.mxu0 %v764
      %v842 = vpop.f32.mrf.mxu0
      %v843 = vadd.f32 %v783, %v842
      %v844 = vpop.f32.mrf.mxu0
      %845 = vdwg.mxu0
      %vm846 = vcmp.ge.f32.partialorder %v843, 0.0
      %v847 = vmul.f32 %v843, 0.01
      %v848 = vsel %vm846, %v843, %v847
      %v849 = vpack.c.bf16 %v848, %v848
      %v850 = vld [vmem:[%s7] sm:$0xf]
      %v851 = vld [vmem:[%s7 + $0x4] sm:$0xf]
      %v852 = vld [vmem:[%s8] sm:$0x1]
      %v854 = vperm.slane %v852, 0
      %v858 = vunpack.c.l.b16 %v850
      %v859 = vunpack.c.l.b16 %v851
      %v860 = vpack.c.b16 %v859, %v858
      %vm862 = vcmask 130048
      %v864 = vsel %vm862, %v849, 0
      %866 = vmatpush.bf16.msra.mxu0 0
      %867 = vmatpush.bf16.msra.mxu0 0
      %868 = vmatpush.bf16.msra.mxu0 0
      %869 = vmatpush.bf16.msra.mxu0 0
      %870 = vmatpush.bf16.msra.mxu0 0
      %871 = vmatpush.bf16.msra.mxu0 0
      %872 = vmatpush.bf16.msra.mxu0 0
      %873 = vmatpush.bf16.msra.mxu0 %v860
      %874 = vmatmul.bf16.gmra.mxu0 %v864
      %v875 = vpop.f32.mrf.mxu0
      %v876 = vadd.f32 %v854, %v875
      %v877 = vpop.f32.mrf.mxu0
      %878 = vdwg.mxu0
      %879 = vst [vmem:[#allocation8] sm:$0xff] %v876
    $region53: #{tpu_custom_call.1} parent=1 // pred_fallthru
      _
    // Predicated region
    $region54: #{tpu_custom_call.1} parent=1 // pred_check
      _
    $region55: #{tpu_custom_call.1} parent=1 // pred_check_branch
      %881 = sbr.rel (0) target = $region57
    $region56: #{tpu_custom_call.1} parent=1 // pred_region
      %883 = vsyncadd [#allocation5], 0
      %s885 = sshll.u32 [#allocation8], 4
      %s886 = int_to_ptr.vmem [resolvable:$true] %s885
      %s887 = sshll.u32 %s9, 4
      %s888 = int_to_ptr.hbm [resolvable:$true] %s887
      %890 = dma.vmem_to_hbm [thread:$0]  %s886, 128, %s888, [#allocation5]
    $region57: #{tpu_custom_call.1} parent=1 // pred_fallthru
      _
    // Predicated region
    $region58: #{tpu_custom_call.1} parent=1 // pred_check
      _
    $region59: #{tpu_custom_call.1} parent=1 // pred_check_branch
      %892 = sbr.rel (0) target = $region61
    $region60: #{tpu_custom_call.1} parent=1 // pred_region
      %894 = dma.done [#allocation5], 128
    $region61: #{tpu_custom_call.1} parent=1 // pred_fallthru
      _
    %895 = vsyncpa [#allocation4], 1
    %896 = vsyncpa [#allocation7], 1
    %897 = vsyncpa [#allocation5], 1

</llo_original>
